<compile_context>
chip_gen: v5e
topology: v5e:2x2
jax: 0.10.0
libtpu: 0.0.40
codegen_flags: <defaults>
</compile_context>

<pallas_src>
import jax
import jax.numpy as jnp
from jax.experimental import pallas as pl
from jax.experimental.pallas import tpu as pltpu

LANE = 128
SUBLANE = 8


def _round_up(n, m):
    return ((n + m - 1) // m) * m


def _make_encoder_kernel(num_layers):
    """Fused kernel over the whole Linear+ReLU stack.

    refs = (x_ref, w0_ref, b0_ref, ..., w{L-1}_ref, b{L-1}_ref, o_ref).
    All refs live in VMEM; intermediate activations never leave the chip.
    """

    def kernel(*refs):
        x_ref = refs[0]
        o_ref = refs[-1]
        h = x_ref[...]
        # Static Python loop -> fully unrolled (per-layer shapes differ, and
        # unrolling gives the scheduler full cross-layer visibility).
        for i in range(num_layers):
            w = refs[1 + 2 * i][...]
            b = refs[2 + 2 * i][...]          # pre-broadcast to (TM, N_pad)
            h = jnp.dot(h, w, preferred_element_type=jnp.float32) + b
            h = jnp.maximum(h, 0.0)           # final layer also has ReLU (per spec)
        o_ref[...] = h.astype(o_ref.dtype)

    return kernel


def _encoder_pallas(x, params):
    """One pallas_call; `params` is a list of (w (K_pad, N_pad), b (TM, N_pad))."""
    M, n_in = x.shape
    num_layers = len(params)
    tm = params[0][1].shape[0]            # M-tile == bias rows
    n_out_pad = params[-1][0].shape[1]

    flat = []
    in_specs = [pl.BlockSpec((tm, n_in), lambda i: (i, 0))]
    for w, b in params:
        flat += [w, b]
        # Constant index_map: same block every grid step -> stays VMEM-resident.
        in_specs.append(pl.BlockSpec(w.shape, lambda i: (0, 0)))
        in_specs.append(pl.BlockSpec(b.shape, lambda i: (0, 0)))

    return pl.pallas_call(
        _make_encoder_kernel(num_layers),
        out_shape=jax.ShapeDtypeStruct((M, n_out_pad), jnp.float32),
        grid=(pl.cdiv(M, tm),),
        in_specs=in_specs,
        out_specs=pl.BlockSpec((tm, n_out_pad), lambda i: (i, 0)),
        compiler_params=pltpu.CompilerParams(
            dimension_semantics=("parallel",)),
    )(x, *flat)


@jax.jit
def encoder_forward(x, kernel_params):
    """Fused Sequential(Linear, ReLU) stack.

    Returns the LANE-padded output (M, round_up(n_out, 128)); columns >= n_out
    are exactly zero.  Slice y[:, :n_out] only where the result is actually
    consumed (keeps the hot path a single fused kernel with no trailing copy).
    """
    return _encoder_pallas(x, kernel_params)


def prepare_kernel_params(params, tm=SUBLANE, lane=LANE):
    """Layout plumbing (done once, offline):
      * pad every layer's output width to a multiple of `lane` with zero weight
        cols + zero bias (ReLU-preserved zeros), so all intermediate activations
        and the output store are lane-dense;
      * pad each layer's K to the previous layer's padded width with zero rows;
      * pre-broadcast each bias to (tm, N_pad) so the in-kernel add is a plain
        vreg add.  `tm` must equal the batch tile used by the wrapper (use a
        larger tm, e.g. 128, when running large batches).
    Returns (padded_params, true_n_out).
    """
    tm = _round_up(max(int(tm), 1), SUBLANE)
    out = []
    n_out = params[-1][0].shape[1]
    prev_pad = params[0][0].shape[0]      # input feature dim left as-is
    for w, b in params:
        k, n = w.shape
        n_pad = _round_up(n, lane)
        w_p = jnp.zeros((prev_pad, n_pad), jnp.float32).at[:k, :n].set(w)
        b_p = jnp.zeros((tm, n_pad), jnp.float32).at[:, :n].set(
            jnp.broadcast_to(b.reshape(1, n), (tm, n)))
        out.append((w_p, b_p))
        prev_pad = n_pad
    return out, n_out


def init_encoder_params(key, n_in, n_out, n_hidden):
    """Deterministic init matching nn.Linear's default (uniform +-1/sqrt(fan_in))."""
    in_list = [n_in] + list(n_hidden)
    out_list = list(n_hidden) + [n_out]
    params = []
    for fan_in, fan_out in zip(in_list, out_list):
        key, kw, kb = jax.random.split(key, 3)
        bound = 1.0 / jnp.sqrt(jnp.float32(fan_in))
        # Stored directly as (in, out) for the kernel layout.
        w = jax.random.uniform(kw, (fan_in, fan_out), jnp.float32, -bound, bound)
        b = jax.random.uniform(kb, (1, fan_out), jnp.float32, -bound, bound)
        params.append((w, b))
    return params


def encoder_reference(x, params):
    h = x
    for w, b in params:
        h = jnp.maximum(h @ w + b, 0.0)
    return h


if __name__ == "__main__":
    # Small shapes consistent with the module: Encoder(n_in=32, n_out=16,
    # n_hidden=[64, 48]), batch = 8.
    n_in, n_out = 32, 16
    n_hidden = [64, 48]
    batch = 8

    key = jax.random.PRNGKey(0)
    key, kx = jax.random.split(key)
    x = jax.random.normal(kx, (batch, n_in), jnp.float32)

    params = init_encoder_params(key, n_in, n_out, n_hidden)
    kernel_params, true_n_out = prepare_kernel_params(params, tm=batch)

    y_pad = encoder_forward(x, kernel_params)
    y_pad = jax.block_until_ready(y_pad)

    # Slice only at the point of consumption.
    out = y_pad[:, :true_n_out]
    ref = encoder_reference(x, params)

    assert out.shape == (batch, n_out)
    assert jnp.allclose(out, ref, atol=1e-5, rtol=1e-5)
    # Padded lanes must be exactly zero (zero cols + zero bias + ReLU).
    assert jnp.all(y_pad[:, true_n_out:] == 0.0)

    print("KERNEL_OK")
</pallas_src>

<mosaic_0001>
module attributes {stable_mosaic.version = 11 : i64} {
  func.func @kernel(%arg0: i32, %arg1: memref<8x32xf32, #tpu.memory_space<vmem>>, %arg2: memref<32x128xf32, #tpu.memory_space<vmem>>, %arg3: memref<8x128xf32, #tpu.memory_space<vmem>>, %arg4: memref<128x128xf32, #tpu.memory_space<vmem>>, %arg5: memref<8x128xf32, #tpu.memory_space<vmem>>, %arg6: memref<128x128xf32, #tpu.memory_space<vmem>>, %arg7: memref<8x128xf32, #tpu.memory_space<vmem>>, %arg8: memref<8x128xf32, #tpu.memory_space<vmem>>) attributes {dimension_semantics = [#tpu.dimension_semantics<parallel>], iteration_bounds = array<i64: 1>, scalar_prefetch = 0 : i64, scratch_operands = 0 : i64, tpu.core_type = #tpu.core_type<tc>, window_params = [{transform_indices = @transform_0, window_bounds = array<i64: 8, 32>}, {pipeline_mode = #tpu.pipeline_mode<synchronous>, transform_indices = @transform_1, window_bounds = array<i64: 32, 128>}, {pipeline_mode = #tpu.pipeline_mode<synchronous>, transform_indices = @transform_2, window_bounds = array<i64: 8, 128>}, {pipeline_mode = #tpu.pipeline_mode<synchronous>, transform_indices = @transform_3, window_bounds = array<i64: 128, 128>}, {pipeline_mode = #tpu.pipeline_mode<synchronous>, transform_indices = @transform_4, window_bounds = array<i64: 8, 128>}, {pipeline_mode = #tpu.pipeline_mode<synchronous>, transform_indices = @transform_5, window_bounds = array<i64: 128, 128>}, {pipeline_mode = #tpu.pipeline_mode<synchronous>, transform_indices = @transform_6, window_bounds = array<i64: 8, 128>}, {transform_indices = @transform_7, window_bounds = array<i64: 8, 128>}]} {
    %c0 = arith.constant 0 : index
    %c0_0 = arith.constant 0 : index
    %0 = vector.load %arg1[%c0, %c0_0] : memref<8x32xf32, #tpu.memory_space<vmem>>, vector<8x32xf32>
    %c0_1 = arith.constant 0 : index
    %c0_2 = arith.constant 0 : index
    %1 = vector.load %arg2[%c0_1, %c0_2] : memref<32x128xf32, #tpu.memory_space<vmem>>, vector<32x128xf32>
    %c0_3 = arith.constant 0 : index
    %c0_4 = arith.constant 0 : index
    %2 = vector.load %arg3[%c0_3, %c0_4] : memref<8x128xf32, #tpu.memory_space<vmem>>, vector<8x128xf32>
    %cst = arith.constant dense<0.000000e+00> : vector<8x128xf32>
    %3 = tpu.matmul %0, %1, %cst {dimension_numbers = #tpu.dot_dimension_numbers<[1], [0], [0], [1], [0, 0, 1, 1], [], []>} : vector<8x32xf32>, vector<32x128xf32>, vector<8x128xf32> -> vector<8x128xf32>
    %4 = arith.addf %3, %2 : vector<8x128xf32>
    %cst_5 = arith.constant 0.000000e+00 : f32
    %5 = vector.broadcast %cst_5 : f32 to vector<8x128xf32>
    %6 = arith.maximumf %4, %5 : vector<8x128xf32>
    %c0_6 = arith.constant 0 : index
    %c0_7 = arith.constant 0 : index
    %7 = vector.load %arg4[%c0_6, %c0_7] : memref<128x128xf32, #tpu.memory_space<vmem>>, vector<128x128xf32>
    %c0_8 = arith.constant 0 : index
    %c0_9 = arith.constant 0 : index
    %8 = vector.load %arg5[%c0_8, %c0_9] : memref<8x128xf32, #tpu.memory_space<vmem>>, vector<8x128xf32>
    %cst_10 = arith.constant dense<0.000000e+00> : vector<8x128xf32>
    %9 = tpu.matmul %6, %7, %cst_10 {dimension_numbers = #tpu.dot_dimension_numbers<[1], [0], [0], [1], [0, 0, 1, 1], [], []>} : vector<8x128xf32>, vector<128x128xf32>, vector<8x128xf32> -> vector<8x128xf32>
    %10 = arith.addf %9, %8 : vector<8x128xf32>
    %cst_11 = arith.constant 0.000000e+00 : f32
    %11 = vector.broadcast %cst_11 : f32 to vector<8x128xf32>
    %12 = arith.maximumf %10, %11 : vector<8x128xf32>
    %c0_12 = arith.constant 0 : index
    %c0_13 = arith.constant 0 : index
    %13 = vector.load %arg6[%c0_12, %c0_13] : memref<128x128xf32, #tpu.memory_space<vmem>>, vector<128x128xf32>
    %c0_14 = arith.constant 0 : index
    %c0_15 = arith.constant 0 : index
    %14 = vector.load %arg7[%c0_14, %c0_15] : memref<8x128xf32, #tpu.memory_space<vmem>>, vector<8x128xf32>
    %cst_16 = arith.constant dense<0.000000e+00> : vector<8x128xf32>
    %15 = tpu.matmul %12, %13, %cst_16 {dimension_numbers = #tpu.dot_dimension_numbers<[1], [0], [0], [1], [0, 0, 1, 1], [], []>} : vector<8x128xf32>, vector<128x128xf32>, vector<8x128xf32> -> vector<8x128xf32>
    %16 = arith.addf %15, %14 : vector<8x128xf32>
    %cst_17 = arith.constant 0.000000e+00 : f32
    %17 = vector.broadcast %cst_17 : f32 to vector<8x128xf32>
    %18 = arith.maximumf %16, %17 : vector<8x128xf32>
    %c0_18 = arith.constant 0 : index
    %c0_19 = arith.constant 0 : index
    %19 = vector.load %arg8[%c0_18, %c0_19] : memref<8x128xf32, #tpu.memory_space<vmem>>, vector<8x128xf32>
    tpu.vector_store %arg8[%c0_18, %c0_19], %18 {strides = array<i32>} : memref<8x128xf32, #tpu.memory_space<vmem>>, vector<8x128xf32>,
    return
  }
  func.func @transform_0(%arg0: i32) -> (i32, i32) {
    %c0_i32 = arith.constant 0 : i32
    %c0_i32_0 = arith.constant 0 : i32
    return %arg0, %c0_i32 : i32, i32
  }
  func.func @transform_1(%arg0: i32) -> (i32, i32) {
    %c0_i32 = arith.constant 0 : i32
    %c0_i32_0 = arith.constant 0 : i32
    %c0_i32_1 = arith.constant 0 : i32
    return %c0_i32, %c0_i32_0 : i32, i32
  }
  func.func @transform_2(%arg0: i32) -> (i32, i32) {
    %c0_i32 = arith.constant 0 : i32
    %c0_i32_0 = arith.constant 0 : i32
    %c0_i32_1 = arith.constant 0 : i32
    return %c0_i32, %c0_i32_0 : i32, i32
  }
  func.func @transform_3(%arg0: i32) -> (i32, i32) {
    %c0_i32 = arith.constant 0 : i32
    %c0_i32_0 = arith.constant 0 : i32
    %c0_i32_1 = arith.constant 0 : i32
    return %c0_i32, %c0_i32_0 : i32, i32
  }
  func.func @transform_4(%arg0: i32) -> (i32, i32) {
    %c0_i32 = arith.constant 0 : i32
    %c0_i32_0 = arith.constant 0 : i32
    %c0_i32_1 = arith.constant 0 : i32
    return %c0_i32, %c0_i32_0 : i32, i32
  }
  func.func @transform_5(%arg0: i32) -> (i32, i32) {
    %c0_i32 = arith.constant 0 : i32
    %c0_i32_0 = arith.constant 0 : i32
    %c0_i32_1 = arith.constant 0 : i32
    return %c0_i32, %c0_i32_0 : i32, i32
  }
  func.func @transform_6(%arg0: i32) -> (i32, i32) {
    %c0_i32 = arith.constant 0 : i32
    %c0_i32_0 = arith.constant 0 : i32
    %c0_i32_1 = arith.constant 0 : i32
    return %c0_i32, %c0_i32_0 : i32, i32
  }
  func.func @transform_7(%arg0: i32) -> (i32, i32) {
    %c0_i32 = arith.constant 0 : i32
    %c0_i32_0 = arith.constant 0 : i32
    return %arg0, %c0_i32 : i32, i32
  }
}

</mosaic_0001>

<llo_original>
// kernel: encoder_forward.1
$region0: #{encoder_forward.1}
  #allocation0 [shape = 'u32[]', space=smem, size = 0x4, offset = 0x4, fixed_abs, tag = 'smem constant byte address 0x4 - core index']
  #allocation1 [shape = 'u32[72,128]{1,0:T(1,128)}', space=vmem, size = 0x9000, scoped, tag = 'internal scratch']
  %s0 = inlined_call_operand.hbm [shape: f32[8,32], index: 0, kind: input, shape index: {}]
  %s1 = inlined_call_operand.hbm [shape: f32[32,128], index: 1, kind: input, shape index: {}]
  %s2 = inlined_call_operand.hbm [shape: f32[8,128], index: 2, kind: input, shape index: {}]
  %s3 = inlined_call_operand.hbm [shape: f32[128,128], index: 3, kind: input, shape index: {}]
  %s4 = inlined_call_operand.hbm [shape: f32[8,128], index: 4, kind: input, shape index: {}]
  %s5 = inlined_call_operand.hbm [shape: f32[128,128], index: 5, kind: input, shape index: {}]
  %s6 = inlined_call_operand.hbm [shape: f32[8,128], index: 6, kind: input, shape index: {}]
  %s7 = inlined_call_operand.hbm [shape: f32[8,128], index: 7, kind: output, shape index: {}]
  %s8 = sld [smem:[#allocation0]]
  $region66: #{encoder_forward.1} parent=0
    _
  %s10 = ssub.s32 1, %s8
  %s11 = scalar_select 0, %s10, %s8
  $region1: #{encoder_forward.1} parent=0
    #allocation2 [shape = 'u8[4096]{0}', space=vmem, size = 0x1000, scoped, tag = 'input window, operand 0, single buffered']
    #allocation3 [shape = 's32[1]{0}', space=sflag, size = 0x4, scoped, tag = 'scoped memory for encoder_forward.1']
    #allocation4 [shape = 's32[1]{0}', space=sflag, size = 0x4, scoped, tag = 'scoped memory for encoder_forward.1']
    #allocation5 [shape = 'u8[16384]{0}', space=vmem, size = 0x4000, scoped, tag = 'input window, operand 1, single buffered']
    #allocation6 [shape = 's32[1]{0}', space=sflag, size = 0x4, scoped, tag = 'scoped memory for encoder_forward.1']
    #allocation7 [shape = 'u8[4096]{0}', space=vmem, size = 0x1000, scoped, tag = 'input window, operand 2, single buffered']
    #allocation8 [shape = 'u8[65536]{0}', space=vmem, size = 0x10000, scoped, tag = 'input window, operand 3, single buffered']
    #allocation9 [shape = 's32[1]{0}', space=sflag, size = 0x4, scoped, tag = 'scoped memory for encoder_forward.1']
    #allocation10 [shape = 'u8[4096]{0}', space=vmem, size = 0x1000, scoped, tag = 'input window, operand 4, single buffered']
    #allocation11 [shape = 'u8[65536]{0}', space=vmem, size = 0x10000, scoped, tag = 'input window, operand 5, single buffered']
    #allocation12 [shape = 's32[1]{0}', space=sflag, size = 0x4, scoped, tag = 'scoped memory for encoder_forward.1']
    #allocation13 [shape = 'u8[4096]{0}', space=vmem, size = 0x1000, scoped, tag = 'input window, operand 6, single buffered']
    #allocation14 [shape = 'u8[4096]{0}', space=vmem, size = 0x1000, scoped, tag = 'output window, operand 0, single buffered']
    %12 = vsyncpa [#allocation3], 0
    %13 = vsyncpa [#allocation6], 0
    %14 = vsyncpa [#allocation9], 0
    %15 = vsyncpa [#allocation12], 0
    %16 = vsyncpa [#allocation4], 0
    // Predicated region
    $region2: #{encoder_forward.1} parent=1 // pred_check
      _
    $region3: #{encoder_forward.1} parent=1 // pred_check_branch
      %18 = sbr.rel (0) target = $region5
    $region4: #{encoder_forward.1} parent=1 // pred_region
      %20 = vsyncadd [#allocation3], 0
      %s22 = sshll.u32 %s0, 4
      %s23 = int_to_ptr.hbm [resolvable:$true] %s22
      %s24 = sshll.u32 [#allocation2], 4
      %s25 = int_to_ptr.vmem [resolvable:$true] %s24
      %27 = dma.hbm_to_vmem [thread:$0]  %s23, 128, %s25, [#allocation3]
    $region5: #{encoder_forward.1} parent=1 // pred_fallthru
      _
    // Predicated region
    $region6: #{encoder_forward.1} parent=1 // pred_check
      _
    $region7: #{encoder_forward.1} parent=1 // pred_check_branch
      %29 = sbr.rel (0) target = $region9
    $region8: #{encoder_forward.1} parent=1 // pred_region
      %31 = vsyncadd [#allocation6], 0
      %s32 = sshll.u32 %s1, 4
      %s33 = int_to_ptr.hbm [resolvable:$true] %s32
      %s34 = sshll.u32 [#allocation5], 4
      %s35 = int_to_ptr.vmem [resolvable:$true] %s34
      %40 = dma.hbm_to_vmem [thread:$0]  %s33, 512, %s35, [#allocation6], 128, 128, 8
    $region9: #{encoder_forward.1} parent=1 // pred_fallthru
      _
    // Predicated region
    $region10: #{encoder_forward.1} parent=1 // pred_check
      _
    $region11: #{encoder_forward.1} parent=1 // pred_check_branch
      %42 = sbr.rel (0) target = $region13
    $region12: #{encoder_forward.1} parent=1 // pred_region
      %44 = vsyncadd [#allocation6], 0
      %s46 = sshll.u32 %s2, 4
      %s47 = int_to_ptr.hbm [resolvable:$true] %s46
      %s48 = sshll.u32 [#allocation7], 4
      %s49 = int_to_ptr.vmem [resolvable:$true] %s48
      %51 = dma.hbm_to_vmem [thread:$0]  %s47, 128, %s49, [#allocation6]
    $region13: #{encoder_forward.1} parent=1 // pred_fallthru
      _
    // Predicated region
    $region14: #{encoder_forward.1} parent=1 // pred_check
      _
    $region15: #{encoder_forward.1} parent=1 // pred_check_branch
      %53 = sbr.rel (0) target = $region17
    $region16: #{encoder_forward.1} parent=1 // pred_region
      %55 = vsyncadd [#allocation9], 0
      %s56 = sshll.u32 %s3, 4
      %s57 = int_to_ptr.hbm [resolvable:$true] %s56
      %s58 = sshll.u32 [#allocation8], 4
      %s59 = int_to_ptr.vmem [resolvable:$true] %s58
      %64 = dma.hbm_to_vmem [thread:$0]  %s57, 2048, %s59, [#allocation9], 128, 128, 8
    $region17: #{encoder_forward.1} parent=1 // pred_fallthru
      _
    // Predicated region
    $region18: #{encoder_forward.1} parent=1 // pred_check
      _
    $region19: #{encoder_forward.1} parent=1 // pred_check_branch
      %66 = sbr.rel (0) target = $region21
    $region20: #{encoder_forward.1} parent=1 // pred_region
      %68 = vsyncadd [#allocation9], 0
      %s70 = sshll.u32 %s4, 4
      %s71 = int_to_ptr.hbm [resolvable:$true] %s70
      %s72 = sshll.u32 [#allocation10], 4
      %s73 = int_to_ptr.vmem [resolvable:$true] %s72
      %75 = dma.hbm_to_vmem [thread:$0]  %s71, 128, %s73, [#allocation9]
    $region21: #{encoder_forward.1} parent=1 // pred_fallthru
      _
    // Predicated region
    $region22: #{encoder_forward.1} parent=1 // pred_check
      _
    $region23: #{encoder_forward.1} parent=1 // pred_check_branch
      %77 = sbr.rel (0) target = $region25
    $region24: #{encoder_forward.1} parent=1 // pred_region
      %79 = vsyncadd [#allocation12], 0
      %s80 = sshll.u32 %s5, 4
      %s81 = int_to_ptr.hbm [resolvable:$true] %s80
      %s82 = sshll.u32 [#allocation11], 4
      %s83 = int_to_ptr.vmem [resolvable:$true] %s82
      %88 = dma.hbm_to_vmem [thread:$0]  %s81, 2048, %s83, [#allocation12], 128, 128, 8
    $region25: #{encoder_forward.1} parent=1 // pred_fallthru
      _
    // Predicated region
    $region26: #{encoder_forward.1} parent=1 // pred_check
      _
    $region27: #{encoder_forward.1} parent=1 // pred_check_branch
      %90 = sbr.rel (0) target = $region29
    $region28: #{encoder_forward.1} parent=1 // pred_region
      %92 = vsyncadd [#allocation12], 0
      %s94 = sshll.u32 %s6, 4
      %s95 = int_to_ptr.hbm [resolvable:$true] %s94
      %s96 = sshll.u32 [#allocation13], 4
      %s97 = int_to_ptr.vmem [resolvable:$true] %s96
      %99 = dma.hbm_to_vmem [thread:$0]  %s95, 128, %s97, [#allocation12]
    $region29: #{encoder_forward.1} parent=1 // pred_fallthru
      _
    // Predicated region
    $region30: #{encoder_forward.1} parent=1 // pred_check
      _
    $region31: #{encoder_forward.1} parent=1 // pred_check_branch
      %101 = sbr.rel (0) target = $region33
    $region32: #{encoder_forward.1} parent=1 // pred_region
      %103 = dma.done [#allocation3], 128
    $region33: #{encoder_forward.1} parent=1 // pred_fallthru
      _
    // Predicated region
    $region34: #{encoder_forward.1} parent=1 // pred_check
      _
    $region35: #{encoder_forward.1} parent=1 // pred_check_branch
      %105 = sbr.rel (0) target = $region37
    $region36: #{encoder_forward.1} parent=1 // pred_region
      %107 = dma.done [#allocation6], 512
    $region37: #{encoder_forward.1} parent=1 // pred_fallthru
      _
    // Predicated region
    $region38: #{encoder_forward.1} parent=1 // pred_check
      _
    $region39: #{encoder_forward.1} parent=1 // pred_check_branch
      %109 = sbr.rel (0) target = $region41
    $region40: #{encoder_forward.1} parent=1 // pred_region
      %111 = dma.done [#allocation6], 128
    $region41: #{encoder_forward.1} parent=1 // pred_fallthru
      _
    // Predicated region
    $region42: #{encoder_forward.1} parent=1 // pred_check
      _
    $region43: #{encoder_forward.1} parent=1 // pred_check_branch
      %113 = sbr.rel (0) target = $region45
    $region44: #{encoder_forward.1} parent=1 // pred_region
      %115 = dma.done [#allocation9], 2048
    $region45: #{encoder_forward.1} parent=1 // pred_fallthru
      _
    // Predicated region
    $region46: #{encoder_forward.1} parent=1 // pred_check
      _
    $region47: #{encoder_forward.1} parent=1 // pred_check_branch
      %117 = sbr.rel (0) target = $region49
    $region48: #{encoder_forward.1} parent=1 // pred_region
      %119 = dma.done [#allocation9], 128
    $region49: #{encoder_forward.1} parent=1 // pred_fallthru
      _
    // Predicated region
    $region50: #{encoder_forward.1} parent=1 // pred_check
      _
    $region51: #{encoder_forward.1} parent=1 // pred_check_branch
      %121 = sbr.rel (0) target = $region53
    $region52: #{encoder_forward.1} parent=1 // pred_region
      %123 = dma.done [#allocation12], 2048
    $region53: #{encoder_forward.1} parent=1 // pred_fallthru
      _
    // Predicated region
    $region54: #{encoder_forward.1} parent=1 // pred_check
      _
    $region55: #{encoder_forward.1} parent=1 // pred_check_branch
      %125 = sbr.rel (0) target = $region57
    $region56: #{encoder_forward.1} parent=1 // pred_region
      %127 = dma.done [#allocation12], 128
    $region57: #{encoder_forward.1} parent=1 // pred_fallthru
      _
    %v128 = vld [vmem:[#allocation2] sm:$0xff]
    %v129 = vld [vmem:[#allocation5] sm:$0xff]
    %v130 = vld [vmem:[#allocation5 + $0x8] sm:$0xff]
    %v131 = vld [vmem:[#allocation5 + $0x10] sm:$0xff]
    %v132 = vld [vmem:[#allocation5 + $0x18] sm:$0xff]
    %v133 = vld [vmem:[#allocation7] sm:$0xff]
    %vm134 = vcmask 261120
    %v136 = vsel %vm134, %v128, 0
    %138 = vmatpush.msra.mxu0 0.0
    %139 = vmatpush.msra.mxu0 0.0
    %140 = vmatpush.msra.mxu0 0.0
    %141 = vmatpush.msra.mxu0 0.0
    %142 = vmatpush.msra.mxu0 0.0
    %143 = vmatpush.msra.mxu0 0.0
    %144 = vmatpush.msra.mxu0 0.0
    %145 = vmatpush.msra.mxu0 0.0
    %146 = vmatpush.msra.mxu0 0.0
    %147 = vmatpush.msra.mxu0 0.0
    %148 = vmatpush.msra.mxu0 0.0
    %149 = vmatpush.msra.mxu0 0.0
    %150 = vmatpush.msra.mxu0 %v132
    %151 = vmatpush.msra.mxu0 %v131
    %152 = vmatpush.msra.mxu0 %v130
    %153 = vmatpush.msra.mxu0 %v129
    %154 = vmatmul.f32.gmra.mxu0 %v136
    %v155 = vpop.f32.mrf.mxu0
    %v156 = vadd.f32 %v133, %v155
    %157 = vdwg.mxu0
    %v158 = vmax.f32 %v156, 0.0
    %v159 = vld [vmem:[#allocation8] sm:$0xff]
    %v160 = vld [vmem:[#allocation8 + $0x8] sm:$0xff]
    %v161 = vld [vmem:[#allocation8 + $0x10] sm:$0xff]
    %v162 = vld [vmem:[#allocation8 + $0x18] sm:$0xff]
    %v163 = vld [vmem:[#allocation8 + $0x20] sm:$0xff]
    %v164 = vld [vmem:[#allocation8 + $0x28] sm:$0xff]
    %v165 = vld [vmem:[#allocation8 + $0x30] sm:$0xff]
    %v166 = vld [vmem:[#allocation8 + $0x38] sm:$0xff]
    %v167 = vld [vmem:[#allocation8 + $0x40] sm:$0xff]
    %v168 = vld [vmem:[#allocation8 + $0x48] sm:$0xff]
    %v169 = vld [vmem:[#allocation8 + $0x50] sm:$0xff]
    %v170 = vld [vmem:[#allocation8 + $0x58] sm:$0xff]
    %v171 = vld [vmem:[#allocation8 + $0x60] sm:$0xff]
    %v172 = vld [vmem:[#allocation8 + $0x68] sm:$0xff]
    %v173 = vld [vmem:[#allocation8 + $0x70] sm:$0xff]
    %v174 = vld [vmem:[#allocation8 + $0x78] sm:$0xff]
    %v175 = vld [vmem:[#allocation10] sm:$0xff]
    %176 = vmatpush.msra.mxu0 %v174
    %177 = vmatpush.msra.mxu0 %v173
    %178 = vmatpush.msra.mxu0 %v172
    %179 = vmatpush.msra.mxu0 %v171
    %180 = vmatpush.msra.mxu0 %v170
    %181 = vmatpush.msra.mxu0 %v169
    %182 = vmatpush.msra.mxu0 %v168
    %183 = vmatpush.msra.mxu0 %v167
    %184 = vmatpush.msra.mxu0 %v166
    %185 = vmatpush.msra.mxu0 %v165
    %186 = vmatpush.msra.mxu0 %v164
    %187 = vmatpush.msra.mxu0 %v163
    %188 = vmatpush.msra.mxu0 %v162
    %189 = vmatpush.msra.mxu0 %v161
    %190 = vmatpush.msra.mxu0 %v160
    %191 = vmatpush.msra.mxu0 %v159
    %192 = vmatmul.f32.gmra.mxu0 %v158
    %v193 = vpop.f32.mrf.mxu0
    %v194 = vadd.f32 %v175, %v193
    %195 = vdwg.mxu0
    %v196 = vmax.f32 %v194, 0.0
    %v197 = vld [vmem:[#allocation11] sm:$0xff]
    %v198 = vld [vmem:[#allocation11 + $0x8] sm:$0xff]
    %v199 = vld [vmem:[#allocation11 + $0x10] sm:$0xff]
    %v200 = vld [vmem:[#allocation11 + $0x18] sm:$0xff]
    %v201 = vld [vmem:[#allocation11 + $0x20] sm:$0xff]
    %v202 = vld [vmem:[#allocation11 + $0x28] sm:$0xff]
    %v203 = vld [vmem:[#allocation11 + $0x30] sm:$0xff]
    %v204 = vld [vmem:[#allocation11 + $0x38] sm:$0xff]
    %v205 = vld [vmem:[#allocation11 + $0x40] sm:$0xff]
    %v206 = vld [vmem:[#allocation11 + $0x48] sm:$0xff]
    %v207 = vld [vmem:[#allocation11 + $0x50] sm:$0xff]
    %v208 = vld [vmem:[#allocation11 + $0x58] sm:$0xff]
    %v209 = vld [vmem:[#allocation11 + $0x60] sm:$0xff]
    %v210 = vld [vmem:[#allocation11 + $0x68] sm:$0xff]
    %v211 = vld [vmem:[#allocation11 + $0x70] sm:$0xff]
    %v212 = vld [vmem:[#allocation11 + $0x78] sm:$0xff]
    %v213 = vld [vmem:[#allocation13] sm:$0xff]
    %214 = vmatpush.msra.mxu0 %v212
    %215 = vmatpush.msra.mxu0 %v211
    %216 = vmatpush.msra.mxu0 %v210
    %217 = vmatpush.msra.mxu0 %v209
    %218 = vmatpush.msra.mxu0 %v208
    %219 = vmatpush.msra.mxu0 %v207
    %220 = vmatpush.msra.mxu0 %v206
    %221 = vmatpush.msra.mxu0 %v205
    %222 = vmatpush.msra.mxu0 %v204
    %223 = vmatpush.msra.mxu0 %v203
    %224 = vmatpush.msra.mxu0 %v202
    %225 = vmatpush.msra.mxu0 %v201
    %226 = vmatpush.msra.mxu0 %v200
    %227 = vmatpush.msra.mxu0 %v199
    %228 = vmatpush.msra.mxu0 %v198
    %229 = vmatpush.msra.mxu0 %v197
    %230 = vmatmul.f32.gmra.mxu0 %v196
    %v231 = vpop.f32.mrf.mxu0
    %v232 = vadd.f32 %v213, %v231
    %233 = vdwg.mxu0
    %v234 = vmax.f32 %v232, 0.0
    %235 = vst [vmem:[#allocation14] sm:$0xff] %v234
    // Predicated region
    $region58: #{encoder_forward.1} parent=1 // pred_check
      _
    $region59: #{encoder_forward.1} parent=1 // pred_check_branch
      %237 = sbr.rel (0) target = $region61
    $region60: #{encoder_forward.1} parent=1 // pred_region
      %239 = vsyncadd [#allocation4], 0
      %s241 = sshll.u32 [#allocation14], 4
      %s242 = int_to_ptr.vmem [resolvable:$true] %s241
      %s243 = sshll.u32 %s7, 4
      %s244 = int_to_ptr.hbm [resolvable:$true] %s243
      %246 = dma.vmem_to_hbm [thread:$0]  %s242, 128, %s244, [#allocation4]
    $region61: #{encoder_forward.1} parent=1 // pred_fallthru
      _
    // Predicated region
    $region62: #{encoder_forward.1} parent=1 // pred_check
      _
    $region63: #{encoder_forward.1} parent=1 // pred_check_branch
      %248 = sbr.rel (0) target = $region65
    $region64: #{encoder_forward.1} parent=1 // pred_region
      %250 = dma.done [#allocation4], 128
    $region65: #{encoder_forward.1} parent=1 // pred_fallthru
      _
    %251 = vsyncpa [#allocation3], 1
    %252 = vsyncpa [#allocation6], 1
    %253 = vsyncpa [#allocation9], 1
    %254 = vsyncpa [#allocation12], 1
    %255 = vsyncpa [#allocation4], 1

</llo_original>
